<compile_context>
chip_gen: v5e
topology: v5e:2x2
jax: 0.10.0
libtpu: 0.0.40
codegen_flags: <defaults>
</compile_context>

<pallas_src>
import jax
import jax.numpy as jnp
from jax import lax
from jax.experimental import pallas as pl
from jax.experimental.pallas import tpu as pltpu


# ---------------------------------------------------------------------------
# Kernels
# ---------------------------------------------------------------------------
def _cls_head_single_k_kernel(x_ref, w_ref, b_ref, o_ref):
    """Full-reduction path (grid = (N,)). No accumulator scratch needed.

    x_ref : (Bp, E_in)   resident activation
    w_ref : (tn, E_in)   weight tile, PyTorch (out, in) layout (no transpose)
    b_ref : (1,  tn)     bias tile
    o_ref : (Bp, tn)     output tile
    """
    acc = lax.dot_general(
        x_ref[...], w_ref[...],
        dimension_numbers=(((1,), (1,)), ((), ())),
        preferred_element_type=jnp.float32)
    o_ref[...] = (acc + b_ref[...].astype(jnp.float32)).astype(o_ref.dtype)


def _cls_head_ktiled_kernel(x_ref, w_ref, b_ref, o_ref, acc_ref):
    """K-tiled path (grid = (N, K)) for weights too large for a full-K tile.

    x_ref  : (grid_k, Bp, tk)  resident, pre-chunked activation (DMA'd once)
    w_ref  : (tn, tk)          weight tile
    b_ref  : (1,  tn)          bias tile
    o_ref  : (Bp, tn)          output tile (resident across the K axis)
    acc_ref: (Bp, tn)          f32 accumulator scratch
    """
    k = pl.program_id(1)

    @pl.when(k == 0)
    def _():
        acc_ref[...] = jnp.zeros_like(acc_ref)

    acc_ref[...] += lax.dot_general(
        x_ref[k], w_ref[...],
        dimension_numbers=(((1,), (1,)), ((), ())),
        preferred_element_type=jnp.float32)

    @pl.when(k == pl.num_programs(1) - 1)
    def _():
        o_ref[...] = (acc_ref[...]
                      + b_ref[...].astype(jnp.float32)).astype(o_ref.dtype)


# ---------------------------------------------------------------------------
# Tiling / budgeting helpers
# ---------------------------------------------------------------------------
_TILE_CANDIDATES = (2048, 1024, 512, 256, 128)


def _vmem_limit_bytes():
    """~85% of this generation's physical VMEM (v5e/v6e: 128 MiB, v7x: 64 MiB)."""
    try:
        cap = int(pltpu.get_tpu_info().vmem_capacity_bytes)
    except Exception:
        cap = 64 * 1024 * 1024
    return max(int(cap * 0.85), 8 * 1024 * 1024)


def _pick_tn(e_out):
    """Largest 128-aligned tile dividing E_out, preferring grid_n >= 2 so the
    'parallel' axis shards across v7x's two TensorCores."""
    best = None
    for c in _TILE_CANDIDATES:
        if e_out % c == 0:
            if best is None:
                best = c
            if e_out // c >= 2:
                return c
    return best if best is not None else e_out


def _pick_tk(e_in, tn, bp, itemsize, budget):
    """Full E_in if the working set fits the VMEM budget, else the largest
    128-aligned divisor that fits."""
    def fits(tk_):
        w_bytes = 2 * tn * tk_ * itemsize        # double-buffered weight tiles
        x_bytes = bp * e_in * itemsize           # resident activation
        o_bytes = 2 * bp * tn * itemsize         # double-buffered output tiles
        acc_bytes = bp * tn * 4                  # f32 accumulator (K-tiled only)
        return w_bytes + x_bytes + o_bytes + acc_bytes <= budget

    if fits(e_in):
        return e_in
    for c in _TILE_CANDIDATES:
        if e_in % c == 0 and fits(c):
            return c
    return 128 if e_in % 128 == 0 else e_in


# ---------------------------------------------------------------------------
# Wrapper
# ---------------------------------------------------------------------------
def classification_head(x, w, b, *, tn=None, tk=None):
    """x: (B, S, E), w: (E_out, E_in) [PyTorch layout], b: (E_out,) -> (B, E_out)."""
    B, S, E = x.shape
    E_out, E_in = w.shape

    # First-token slice in the wrapper: only B*E activation elements leave HBM.
    x0 = x[:, 0, :]

    # Dtype-aware batch padding so vregs are fully sublane-packed.
    sub = {4: 8, 2: 16, 1: 32}.get(x.dtype.itemsize, 8)
    Bp = max(sub, ((B + sub - 1) // sub) * sub)
    if Bp != B:
        x0 = jnp.pad(x0, ((0, Bp - B), (0, 0)))

    vmem_limit = _vmem_limit_bytes()
    budget = int(vmem_limit * 0.75)
    itemsize = w.dtype.itemsize

    tn = tn or _pick_tn(E_out)
    tk = tk or _pick_tk(E_in, tn, Bp, itemsize, budget)
    grid_n = E_out // tn
    grid_k = E_in // tk

    b2 = b.reshape(1, E_out)

    cost = pl.CostEstimate(
        flops=2 * Bp * E_out * E_in,
        transcendentals=0,
        bytes_accessed=((E_out * E_in + E_out) * itemsize
                        + (Bp * E_in + Bp * E_out) * x.dtype.itemsize))

    if grid_k == 1:
        # Full-reduction path: no accumulator, single "parallel" grid axis.
        out = pl.pallas_call(
            _cls_head_single_k_kernel,
            out_shape=jax.ShapeDtypeStruct((Bp, E_out), x.dtype),
            grid_spec=pltpu.PrefetchScalarGridSpec(
                num_scalar_prefetch=0,
                grid=(grid_n,),
                in_specs=[
                    pl.BlockSpec((Bp, E_in), lambda j: (0, 0)),   # resident x
                    pl.BlockSpec((tn, E_in), lambda j: (j, 0)),   # weight stream
                    pl.BlockSpec((1, tn), lambda j: (0, j)),      # bias
                ],
                out_specs=pl.BlockSpec((Bp, tn), lambda j: (0, j)),
            ),
            compiler_params=pltpu.CompilerParams(
                dimension_semantics=("parallel",),
                vmem_limit_bytes=vmem_limit),
            cost_estimate=cost,
        )(x0, w, b2)
    else:
        # K-tiled path: pre-chunk the (tiny) activation so the kernel indexes
        # the major axis (no dynamic lane-dim slicing); x is DMA'd exactly once.
        x3 = x0.reshape(Bp, grid_k, tk).transpose(1, 0, 2)   # (grid_k, Bp, tk)
        out = pl.pallas_call(
            _cls_head_ktiled_kernel,
            out_shape=jax.ShapeDtypeStruct((Bp, E_out), x.dtype),
            grid_spec=pltpu.PrefetchScalarGridSpec(
                num_scalar_prefetch=0,
                grid=(grid_n, grid_k),
                in_specs=[
                    pl.BlockSpec((grid_k, Bp, tk), lambda j, k: (0, 0, 0)),
                    pl.BlockSpec((tn, tk), lambda j, k: (j, k)),
                    pl.BlockSpec((1, tn), lambda j, k: (0, j)),
                ],
                out_specs=pl.BlockSpec((Bp, tn), lambda j, k: (0, j)),
                scratch_shapes=[pltpu.VMEM((Bp, tn), jnp.float32)],
            ),
            compiler_params=pltpu.CompilerParams(
                dimension_semantics=("parallel", "arbitrary"),
                vmem_limit_bytes=vmem_limit),
            cost_estimate=cost,
        )(x3, w, b2)

    return out[:B]


# ---------------------------------------------------------------------------
# Demo / self-check
# ---------------------------------------------------------------------------
if __name__ == "__main__":
    key = jax.random.PRNGKey(0)
    kx, kw, kb, kx2, kw2, kb2 = jax.random.split(key, 6)

    # Small shapes consistent with the module: batch=2, seq=8, embed_size=32.
    B, S, E = 2, 8, 32
    x = jax.random.normal(kx, (B, S, E), dtype=jnp.float32)
    # Deterministic params mirroring __init__: weight ~ N(0, 0.02), bias ~ N(0, 1).
    w = 0.02 * jax.random.normal(kw, (E, E), dtype=jnp.float32)
    b = jax.random.normal(kb, (E,), dtype=jnp.float32)

    out = jax.block_until_ready(classification_head(x, w, b))
    ref = x[:, 0, :] @ w.T + b
    assert out.shape == (B, E)
    assert jnp.allclose(out, ref, atol=1e-5, rtol=1e-5)

    # Also exercise the K-tiled path (forced small tiles) so both code paths
    # are validated on hardware.
    B2, S2, E2 = 2, 8, 512
    x2 = jax.random.normal(kx2, (B2, S2, E2), dtype=jnp.float32)
    w2 = 0.02 * jax.random.normal(kw2, (E2, E2), dtype=jnp.float32)
    b2 = jax.random.normal(kb2, (E2,), dtype=jnp.float32)
    out2 = jax.block_until_ready(classification_head(x2, w2, b2, tn=128, tk=128))
    ref2 = x2[:, 0, :] @ w2.T + b2
    assert jnp.allclose(out2, ref2, atol=1e-3, rtol=1e-3)

    print("KERNEL_OK")
</pallas_src>

<mosaic_0001>
module attributes {stable_mosaic.version = 11 : i64} {
  func.func @_cls_head_single_k_kernel(%arg0: i32, %arg1: memref<8x32xf32, #tpu.memory_space<vmem>>, %arg2: memref<32x32xf32, #tpu.memory_space<vmem>>, %arg3: memref<1x32xf32, #tpu.memory_space<vmem>>, %arg4: memref<8x32xf32, #tpu.memory_space<vmem>>) attributes {dimension_semantics = [#tpu.dimension_semantics<parallel>], iteration_bounds = array<i64: 1>, scalar_prefetch = 0 : i64, scratch_operands = 0 : i64, tpu.core_type = #tpu.core_type<tc>, window_params = [{pipeline_mode = #tpu.pipeline_mode<synchronous>, transform_indices = @transform_0, window_bounds = array<i64: 8, 32>}, {transform_indices = @transform_1, window_bounds = array<i64: 32, 32>}, {transform_indices = @transform_2, window_bounds = array<i64: 1, 32>}, {transform_indices = @transform_3, window_bounds = array<i64: 8, 32>}]} {
    %c0 = arith.constant 0 : index
    %c0_0 = arith.constant 0 : index
    %0 = vector.load %arg1[%c0, %c0_0] : memref<8x32xf32, #tpu.memory_space<vmem>>, vector<8x32xf32>
    %c0_1 = arith.constant 0 : index
    %c0_2 = arith.constant 0 : index
    %1 = vector.load %arg2[%c0_1, %c0_2] : memref<32x32xf32, #tpu.memory_space<vmem>>, vector<32x32xf32>
    %cst = arith.constant dense<0.000000e+00> : vector<8x32xf32>
    %2 = tpu.matmul %0, %1, %cst {dimension_numbers = #tpu.dot_dimension_numbers<[1], [1], [0], [0], [0, 0, 1, 0], [], []>} : vector<8x32xf32>, vector<32x32xf32>, vector<8x32xf32> -> vector<8x32xf32>
    %c0_3 = arith.constant 0 : index
    %c0_4 = arith.constant 0 : index
    %3 = vector.load %arg3[%c0_3, %c0_4] : memref<1x32xf32, #tpu.memory_space<vmem>>, vector<1x32xf32>
    %4 = vector.broadcast %3 : vector<1x32xf32> to vector<8x32xf32>
    %5 = arith.addf %2, %4 : vector<8x32xf32>
    %c0_5 = arith.constant 0 : index
    %c0_6 = arith.constant 0 : index
    %6 = vector.load %arg4[%c0_5, %c0_6] : memref<8x32xf32, #tpu.memory_space<vmem>>, vector<8x32xf32>
    tpu.vector_store %arg4[%c0_5, %c0_6], %5 {strides = array<i32>} : memref<8x32xf32, #tpu.memory_space<vmem>>, vector<8x32xf32>,
    return
  }
  func.func @transform_0(%arg0: i32) -> (i32, i32) {
    %c0_i32 = arith.constant 0 : i32
    %c0_i32_0 = arith.constant 0 : i32
    %c0_i32_1 = arith.constant 0 : i32
    return %c0_i32, %c0_i32_0 : i32, i32
  }
  func.func @transform_1(%arg0: i32) -> (i32, i32) {
    %c0_i32 = arith.constant 0 : i32
    %c0_i32_0 = arith.constant 0 : i32
    return %arg0, %c0_i32 : i32, i32
  }
  func.func @transform_2(%arg0: i32) -> (i32, i32) {
    %c0_i32 = arith.constant 0 : i32
    %c0_i32_0 = arith.constant 0 : i32
    return %c0_i32, %arg0 : i32, i32
  }
  func.func @transform_3(%arg0: i32) -> (i32, i32) {
    %c0_i32 = arith.constant 0 : i32
    %c0_i32_0 = arith.constant 0 : i32
    return %c0_i32, %arg0 : i32, i32
  }
}

</mosaic_0001>

<llo_original>
// kernel: tpu_custom_call.1
$region0: #{tpu_custom_call.1}
  #allocation0 [shape = 'u32[]', space=smem, size = 0x4, offset = 0x4, fixed_abs, tag = 'smem constant byte address 0x4 - core index']
  #allocation1 [shape = 'u32[72,128]{1,0:T(1,128)}', space=vmem, size = 0x9000, scoped, tag = 'internal scratch']
  %s0 = inlined_call_operand.hbm [shape: f32[8,32], index: 0, kind: input, shape index: {}]
  %s1 = inlined_call_operand.hbm [shape: f32[32,32], index: 1, kind: input, shape index: {}]
  %s2 = inlined_call_operand.vmem [shape: f32[1,32], index: 2, kind: input, shape index: {}]
  %s3 = inlined_call_operand.hbm [shape: f32[8,32], index: 3, kind: output, shape index: {}]
  %s4 = sld [smem:[#allocation0]]
  $region30: #{tpu_custom_call.1} parent=0
    _
  %s6 = ssub.s32 1, %s4
  %s7 = scalar_select 0, %s6, %s4
  $region1: #{tpu_custom_call.1} parent=0
    #allocation2 [shape = 'u8[4096]{0}', space=vmem, size = 0x1000, scoped, tag = 'input window, operand 0, single buffered']
    #allocation3 [shape = 's32[1]{0}', space=sflag, size = 0x4, scoped, tag = 'scoped memory for tpu_custom_call.1']
    #allocation4 [shape = 's32[1]{0}', space=sflag, size = 0x4, scoped, tag = 'scoped memory for tpu_custom_call.1']
    #allocation5 [shape = 'u8[16384]{0}', space=vmem, size = 0x4000, scoped, tag = 'input window, operand 1, single buffered']
    #allocation6 [shape = 's32[1]{0}', space=sflag, size = 0x4, scoped, tag = 'scoped memory for tpu_custom_call.1']
    #allocation7 [shape = 'u8[4096]{0}', space=vmem, size = 0x1000, scoped, tag = 'output window, operand 0, single buffered']
    %8 = vsyncpa [#allocation3], 0
    %9 = vsyncpa [#allocation6], 0
    %10 = vsyncpa [#allocation4], 0
    // Predicated region
    $region2: #{tpu_custom_call.1} parent=1 // pred_check
      _
    $region3: #{tpu_custom_call.1} parent=1 // pred_check_branch
      %12 = sbr.rel (0) target = $region5
    $region4: #{tpu_custom_call.1} parent=1 // pred_region
      %14 = vsyncadd [#allocation3], 0
      %s16 = sshll.u32 %s0, 4
      %s17 = int_to_ptr.hbm [resolvable:$true] %s16
      %s18 = sshll.u32 [#allocation2], 4
      %s19 = int_to_ptr.vmem [resolvable:$true] %s18
      %21 = dma.hbm_to_vmem [thread:$0]  %s17, 128, %s19, [#allocation3]
    $region5: #{tpu_custom_call.1} parent=1 // pred_fallthru
      _
    // Predicated region
    $region6: #{tpu_custom_call.1} parent=1 // pred_check
      _
    $region7: #{tpu_custom_call.1} parent=1 // pred_check_branch
      %23 = sbr.rel (0) target = $region9
    $region8: #{tpu_custom_call.1} parent=1 // pred_region
      %25 = vsyncadd [#allocation6], 0
      %s26 = sshll.u32 %s1, 4
      %s27 = int_to_ptr.hbm [resolvable:$true] %s26
      %s28 = sshll.u32 [#allocation5], 4
      %s29 = int_to_ptr.vmem [resolvable:$true] %s28
      %34 = dma.hbm_to_vmem [thread:$0]  %s27, 512, %s29, [#allocation6], 128, 128, 8
    $region9: #{tpu_custom_call.1} parent=1 // pred_fallthru
      _
    // Predicated region
    $region10: #{tpu_custom_call.1} parent=1 // pred_check
      _
    $region11: #{tpu_custom_call.1} parent=1 // pred_check_branch
      %36 = sbr.rel (0) target = $region13
    $region12: #{tpu_custom_call.1} parent=1 // pred_region
      _
    $region13: #{tpu_custom_call.1} parent=1 // pred_fallthru
      _
    // Predicated region
    $region14: #{tpu_custom_call.1} parent=1 // pred_check
      _
    $region15: #{tpu_custom_call.1} parent=1 // pred_check_branch
      %38 = sbr.rel (0) target = $region17
    $region16: #{tpu_custom_call.1} parent=1 // pred_region
      %40 = dma.done [#allocation3], 128
    $region17: #{tpu_custom_call.1} parent=1 // pred_fallthru
      _
    // Predicated region
    $region18: #{tpu_custom_call.1} parent=1 // pred_check
      _
    $region19: #{tpu_custom_call.1} parent=1 // pred_check_branch
      %42 = sbr.rel (0) target = $region21
    $region20: #{tpu_custom_call.1} parent=1 // pred_region
      %44 = dma.done [#allocation6], 512
    $region21: #{tpu_custom_call.1} parent=1 // pred_fallthru
      _
    %v45 = vld [vmem:[#allocation2] sm:$0xff]
    %v46 = vld [vmem:[#allocation5] sm:$0xff]
    %v47 = vld [vmem:[#allocation5 + $0x8] sm:$0xff]
    %v48 = vld [vmem:[#allocation5 + $0x10] sm:$0xff]
    %v49 = vld [vmem:[#allocation5 + $0x18] sm:$0xff]
    %v50 = vld [vmem:[%s2] sm:$0x1]
    %v52 = vperm.slane %v50, 0
    %vm54 = vcmask 261120
    %v56 = vsel %vm54, %v45, 0
    %v59 = vsel %vm54, %v46, 0
    %v62 = vsel %vm54, %v47, 0
    %v65 = vsel %vm54, %v48, 0
    %v68 = vsel %vm54, %v49, 0
    %70 = vmatpush.xpose.msra.mxu0 0.0
    %71 = vmatpush.xpose.msra.mxu0 0.0
    %72 = vmatpush.xpose.msra.mxu0 0.0
    %73 = vmatpush.xpose.msra.mxu0 0.0
    %74 = vmatpush.xpose.msra.mxu0 0.0
    %75 = vmatpush.xpose.msra.mxu0 0.0
    %76 = vmatpush.xpose.msra.mxu0 0.0
    %77 = vmatpush.xpose.msra.mxu0 0.0
    %78 = vmatpush.xpose.msra.mxu0 0.0
    %79 = vmatpush.xpose.msra.mxu0 0.0
    %80 = vmatpush.xpose.msra.mxu0 0.0
    %81 = vmatpush.xpose.msra.mxu0 0.0
    %82 = vmatpush.xpose.msra.mxu0 %v68
    %83 = vmatpush.xpose.msra.mxu0 %v65
    %84 = vmatpush.xpose.msra.mxu0 %v62
    %85 = vmatpush.xpose.msra.mxu0 %v59
    %86 = vmatmul.f32.gmra.mxu0 %v56
    %v87 = vpop.f32.mrf.mxu0
    %v88 = vadd.f32 %v52, %v87
    %89 = vdwg.mxu0
    %90 = vst.msk [vmem:[#allocation7] sm:$0xff] %vm54, %v88
    // Predicated region
    $region22: #{tpu_custom_call.1} parent=1 // pred_check
      _
    $region23: #{tpu_custom_call.1} parent=1 // pred_check_branch
      %92 = sbr.rel (0) target = $region25
    $region24: #{tpu_custom_call.1} parent=1 // pred_region
      %94 = vsyncadd [#allocation4], 0
      %s96 = sshll.u32 [#allocation7], 4
      %s97 = int_to_ptr.vmem [resolvable:$true] %s96
      %s98 = sshll.u32 %s3, 4
      %s99 = int_to_ptr.hbm [resolvable:$true] %s98
      %101 = dma.vmem_to_hbm [thread:$0]  %s97, 128, %s99, [#allocation4]
    $region25: #{tpu_custom_call.1} parent=1 // pred_fallthru
      _
    // Predicated region
    $region26: #{tpu_custom_call.1} parent=1 // pred_check
      _
    $region27: #{tpu_custom_call.1} parent=1 // pred_check_branch
      %103 = sbr.rel (0) target = $region29
    $region28: #{tpu_custom_call.1} parent=1 // pred_region
      %105 = dma.done [#allocation4], 128
    $region29: #{tpu_custom_call.1} parent=1 // pred_fallthru
      _
    %106 = vsyncpa [#allocation3], 1
    %107 = vsyncpa [#allocation6], 1
    %108 = vsyncpa [#allocation4], 1

</llo_original>
